<compile_context>
chip_gen: v6e
topology: v6e:2x2x1
jax: 0.10.0
libtpu: 0.0.40
codegen_flags: <defaults>
</compile_context>

<pallas_src>
import functools

import jax
import jax.numpy as jnp
from jax.experimental import pallas as pl
from jax.experimental.pallas import tpu as pltpu

LANE = 128


def _round_up(x, m):
    return ((x + m - 1) // m) * m


def _device_defaults():
    """Per-generation defaults: (row_tile, num_cores, vmem_cap_bytes)."""
    kind = ""
    try:
        kind = jax.devices()[0].device_kind.lower()
    except Exception:
        pass
    is_v7 = ("v7" in kind) or ("7x" in kind)
    is_v6 = ("v6" in kind) or ("6e" in kind) or ("trillium" in kind)
    # Only v7x has two TensorCores per chip; on v5e/v6e a 2-wide "parallel"
    # axis is just a serial outer loop plus duplicate-block clamping cost.
    default_cores = 2 if is_v7 else 1
    # v6e: 128 MiB VMEM -> big tiles pay off.  v5e (16 MiB scoped default)
    # and v7x (64 MiB physical per TC, 2 TCs active) -> cap at 4096 rows.
    default_row_tile = 8192 if is_v6 else 4096
    vmem_cap = (56 << 20) if is_v7 else (112 << 20)
    return default_row_tile, default_cores, vmem_cap


def _focal_sum_kernel(p_ref, l_ref, o_ref, *, gamma, alpha, rows,
                      blocks_per_core, needs_mask):
    """Accumulates this core's focal-loss partial sums into o_ref (8, LANE)."""
    j = pl.program_id(1)

    # o_ref is this core's resident (8, LANE) partial-sum block across j.
    @pl.when(j == 0)
    def _():
        o_ref[...] = jnp.zeros_like(o_ref)

    p = jax.nn.sigmoid(p_ref[...].astype(jnp.float32))       # EUP
    lab = l_ref[...].astype(jnp.float32)                     # widen on-chip
    pt = lab * p + (1.0 - lab) * (1.0 - p)
    one_minus_pt = 1.0 - pt
    if gamma == 2.0:
        mod = one_minus_pt * one_minus_pt                     # avoid generic pow
    elif gamma == 1.0:
        mod = one_minus_pt
    elif gamma == 0.0:
        mod = jnp.ones_like(one_minus_pt)
    else:
        mod = one_minus_pt ** gamma
    loss = (-alpha) * mod * jnp.log(pt + 1e-10)               # EUP log

    row_tile = loss.shape[0]

    def accumulate(x):
        # Sublane fold down to (8, LANE): the reshape groups whole (8,128)
        # vreg tiles, so this lowers to pure VPU adds (no VMEM round-trip).
        if x.shape[0] % 8 == 0:
            o_ref[...] += jnp.sum(x.reshape(-1, 8, x.shape[-1]), axis=0)
        else:
            # Tiny single-block case (rows not a multiple of 8): one small
            # cross-sublane reduce, negligible.
            o_ref[0:1, :] += jnp.sum(x, axis=0, keepdims=True)

    if needs_mask:
        # Only blocks that can overrun the real row count (the partial tail
        # block, or a clamped duplicate block on the last core) pay for the
        # iota/compare/select; full blocks take the unmasked fast path.
        c = pl.program_id(0)
        blk = c * blocks_per_core + j                 # un-clamped block index
        overruns = (blk + 1) * row_tile > rows

        @pl.when(jnp.logical_not(overruns))
        def _():
            accumulate(loss)

        @pl.when(overruns)
        def _():
            row_ids = blk * row_tile + jax.lax.broadcasted_iota(
                jnp.int32, loss.shape, 0)
            # select (not multiply): garbage VMEM rows may hold NaN/Inf.
            accumulate(jnp.where(row_ids < rows, loss, 0.0))
    else:
        accumulate(loss)


def focal_loss(preds, labels, gamma=2.0, alpha=1.0, average=True,
               row_tile=None, num_cores=None):
    """Matches Focal_Loss.forward(preds, labels) from core/losses.py."""
    assert preds.shape == labels.shape
    assert preds.ndim >= 2, "needs a dim=1 (channel) axis like the PyTorch module"
    C = preds.shape[1]
    total = preds.size

    default_row_tile, default_cores, vmem_cap = _device_defaults()
    if row_tile is None:
        row_tile = default_row_tile
    if num_cores is None:
        num_cores = default_cores

    # Keep bool labels narrow: a 1B->1B cast (usually fused into the producer
    # by XLA) instead of a 4x-wider f32 upcast; the kernel widens on-chip.
    if labels.dtype == jnp.bool_:
        labels = labels.astype(jnp.int8)

    flat_p = preds.reshape(-1)
    flat_l = labels.reshape(-1)

    rows = total // LANE
    main = rows * LANE
    rem = total - main

    # Lane-ragged tail (< 128 elements): plain JAX, instead of padding /
    # copying the whole inputs.
    if rem:
        tp = jax.nn.sigmoid(flat_p[main:].astype(jnp.float32))
        tl = flat_l[main:].astype(jnp.float32)
        tpt = tl * tp + (1.0 - tl) * (1.0 - tp)
        tail_sum = jnp.sum(-((1.0 - tpt) ** gamma) * jnp.log(tpt + 1e-10) * alpha)
    else:
        tail_sum = jnp.float32(0.0)

    denom = jnp.float32(total // C)

    if rows == 0:   # entire input is smaller than one lane row
        out = tail_sum
        return (out / denom if average else out).astype(jnp.float32)

    if rem:
        # TODO(synk): XLA may still materialize this prefix slice; the common
        # total % 128 == 0 path below is a guaranteed zero-copy reshape.
        p2 = jax.lax.slice(flat_p, (0,), (main,)).reshape(rows, LANE)
        l2 = jax.lax.slice(flat_l, (0,), (main,)).reshape(rows, LANE)
    else:
        p2 = flat_p.reshape(rows, LANE)   # zero-copy reshape
        l2 = flat_l.reshape(rows, LANE)

    p_item = p2.dtype.itemsize
    l_item = l2.dtype.itemsize
    # Sublane packing multiple: 8 for f32, 16 for bf16, 32 for int8.
    sub = 8 * max(1, 4 // min(p_item, l_item))

    # Keep 2 inputs x 2 pipeline buffers inside the per-core VMEM budget.
    bytes_per_row = LANE * (p_item + l_item)
    max_rows_fit = max(sub, (vmem_cap - (4 << 20)) // (2 * bytes_per_row))
    row_tile = max(1, min(int(row_tile), int(max_rows_fit)))

    if _round_up(row_tile, sub) >= rows:
        row_tile = rows                       # single block == full array dims
    else:
        row_tile = _round_up(row_tile, sub)   # tiled: must be sub-aligned

    num_blocks = pl.cdiv(rows, row_tile)
    num_cores = max(1, min(int(num_cores), num_blocks))
    bpc = pl.cdiv(num_blocks, num_cores)             # blocks per core
    needs_clamp = num_cores * bpc > num_blocks        # last core has spare steps
    needs_mask = (num_cores * bpc * row_tile) != rows
    max_block = num_blocks - 1

    def in_map(c, j):
        blk = c * bpc + j
        if needs_clamp:
            blk = jnp.minimum(blk, max_block)          # keep DMA in-bounds
        return (blk, 0)

    kern = functools.partial(
        _focal_sum_kernel, gamma=gamma, alpha=alpha, rows=rows,
        blocks_per_core=bpc, needs_mask=needs_mask)

    block_bytes = row_tile * LANE * (p_item + l_item)
    vmem_limit = int(min(vmem_cap, max(32 << 20, 2 * block_bytes + (4 << 20))))

    cost = pl.CostEstimate(
        flops=12 * main,
        transcendentals=2 * main,                     # sigmoid + log per elem
        bytes_accessed=main * (p_item + l_item) + num_cores * 8 * LANE * 4,
    )

    partials = pl.pallas_call(
        kern,
        out_shape=jax.ShapeDtypeStruct((num_cores * 8, LANE), jnp.float32),
        grid_spec=pltpu.PrefetchScalarGridSpec(
            num_scalar_prefetch=0,
            grid=(num_cores, bpc),
            in_specs=[
                pl.BlockSpec((row_tile, LANE), in_map),
                pl.BlockSpec((row_tile, LANE), in_map),
            ],
            out_specs=pl.BlockSpec((8, LANE), lambda c, j: (c, 0)),
        ),
        compiler_params=pltpu.CompilerParams(
            dimension_semantics=("parallel", "arbitrary"),
            vmem_limit_bytes=vmem_limit),
        cost_estimate=cost,
    )(p2, l2)

    # Tiny (num_cores*8, 128) cross-lane reduce in plain XLA.
    total_sum = jnp.sum(partials) + tail_sum
    if average:
        # mean over the shape with dim=1 summed out: divide by total / C.
        return (total_sum / denom).astype(jnp.float32)
    return total_sum.astype(jnp.float32)


def _focal_loss_ref(preds, labels, gamma=2.0, alpha=1.0, average=True):
    p = jax.nn.sigmoid(preds.astype(jnp.float32))
    lab = labels.astype(jnp.float32)
    pt = lab * p + (1.0 - lab) * (1.0 - p)
    loss = -((1.0 - pt) ** gamma) * jnp.log(pt + 1e-10) * alpha
    loss = jnp.sum(loss, axis=1)
    return loss.mean() if average else loss.sum()


if __name__ == "__main__":
    key = jax.random.PRNGKey(0)
    k1, k2, k3, k4, k5, k6, k7, k8 = jax.random.split(key, 8)

    # Test 1: canonical small NCHW shape; bool labels stay narrow (int8 path).
    preds1 = jax.random.normal(k1, (2, 4, 16, 16), dtype=jnp.float32)
    labels1_b = jax.random.bernoulli(k2, 0.3, (2, 4, 16, 16))
    out1 = jax.block_until_ready(focal_loss(preds1, labels1_b))
    ref1 = _focal_loss_ref(preds1, labels1_b.astype(jnp.float32))
    assert jnp.allclose(out1, ref1, rtol=1e-5, atol=1e-5), (out1, ref1)

    # Test 2: average=False path.
    out1s = jax.block_until_ready(focal_loss(preds1, labels1_b, average=False))
    ref1s = _focal_loss_ref(preds1, labels1_b.astype(jnp.float32), average=False)
    assert jnp.allclose(out1s, ref1s, rtol=1e-5, atol=1e-5), (out1s, ref1s)

    # Test 3: tiny row_tile + explicit num_cores=2 forces a multi-block grid,
    # a 2-core split with block-index clamping, and the gated in-kernel mask.
    preds2 = jax.random.normal(k3, (2, 4, 20, 16), dtype=jnp.float32)
    labels2 = jax.random.bernoulli(k4, 0.3, (2, 4, 20, 16)).astype(jnp.float32)
    out2 = jax.block_until_ready(
        focal_loss(preds2, labels2, row_tile=8, num_cores=2))
    ref2 = _focal_loss_ref(preds2, labels2)
    assert jnp.allclose(out2, ref2, rtol=1e-5, atol=1e-5), (out2, ref2)

    # Test 4: lane-ragged element count (total % 128 != 0) -> kernel prefix +
    # plain-JAX tail, no full-array padding copy.
    preds3 = jax.random.normal(k5, (2, 3, 10, 10), dtype=jnp.float32)
    labels3 = jax.random.bernoulli(k6, 0.3, (2, 3, 10, 10)).astype(jnp.float32)
    out3 = jax.block_until_ready(focal_loss(preds3, labels3))
    ref3 = _focal_loss_ref(preds3, labels3)
    assert jnp.allclose(out3, ref3, rtol=1e-5, atol=1e-5), (out3, ref3)

    # Test 5: int8 labels with a multi-block grid and a partial edge block.
    preds4 = jax.random.normal(k7, (2, 4, 96, 16), dtype=jnp.float32)
    labels4_b = jax.random.bernoulli(k8, 0.3, (2, 4, 96, 16))
    out4 = jax.block_until_ready(focal_loss(preds4, labels4_b, row_tile=64))
    ref4 = _focal_loss_ref(preds4, labels4_b.astype(jnp.float32))
    assert jnp.allclose(out4, ref4, rtol=1e-5, atol=1e-5), (out4, ref4)

    print("KERNEL_OK")
</pallas_src>

<mosaic_0001>
module attributes {stable_mosaic.version = 11 : i64} {
  func.func @_focal_sum_kernel(%arg0: i32, %arg1: i32, %arg2: memref<16x128xf32, #tpu.memory_space<vmem>>, %arg3: memref<16x128xi8, #tpu.memory_space<vmem>>, %arg4: memref<8x128xf32, #tpu.memory_space<vmem>>) attributes {dimension_semantics = [#tpu.dimension_semantics<parallel>, #tpu.dimension_semantics<arbitrary>], iteration_bounds = array<i64: 1, 1>, scalar_prefetch = 0 : i64, scratch_operands = 0 : i64, tpu.core_type = #tpu.core_type<tc>, window_params = [{transform_indices = @transform_0, window_bounds = array<i64: 16, 128>}, {transform_indices = @transform_1, window_bounds = array<i64: 16, 128>}, {transform_indices = @transform_2, window_bounds = array<i64: 8, 128>}]} {
    %c0_i32 = arith.constant 0 : i32
    %0 = arith.cmpi eq, %arg1, %c0_i32 : i32
    %1 = arith.extui %0 : i1 to i32
    %c0_i32_0 = arith.constant 0 : i32
    %2 = arith.cmpi ne, %1, %c0_i32_0 : i32
    scf.if %2 {
      %cst_14 = arith.constant 0.000000e+00 : f32
      %32 = vector.broadcast %cst_14 : f32 to vector<8x128xf32>
      %c0_15 = arith.constant 0 : index
      %c0_16 = arith.constant 0 : index
      %33 = vector.load %arg4[%c0_15, %c0_16] : memref<8x128xf32, #tpu.memory_space<vmem>>, vector<8x128xf32>
      tpu.vector_store %arg4[%c0_15, %c0_16], %32 {strides = array<i32>} : memref<8x128xf32, #tpu.memory_space<vmem>>, vector<8x128xf32>,
    } else {
    }
    %c0 = arith.constant 0 : index
    %c0_1 = arith.constant 0 : index
    %3 = vector.load %arg2[%c0, %c0_1] : memref<16x128xf32, #tpu.memory_space<vmem>>, vector<16x128xf32>
    %4 = arith.negf %3 : vector<16x128xf32>
    %5 = math.exp %4 : vector<16x128xf32>
    %cst = arith.constant 1.000000e+00 : f32
    %6 = vector.broadcast %cst : f32 to vector<16x128xf32>
    %7 = arith.addf %6, %5 : vector<16x128xf32>
    %8 = arith.divf %6, %7 : vector<16x128xf32>
    %c0_2 = arith.constant 0 : index
    %c0_3 = arith.constant 0 : index
    %9 = vector.load %arg3[%c0_2, %c0_3] : memref<16x128xi8, #tpu.memory_space<vmem>>, vector<16x128xi8>
    %10 = arith.sitofp %9 : vector<16x128xi8> to vector<16x128xf32>
    %11 = arith.mulf %10, %8 : vector<16x128xf32>
    %cst_4 = arith.constant 1.000000e+00 : f32
    %12 = vector.broadcast %cst_4 : f32 to vector<16x128xf32>
    %13 = arith.subf %12, %10 : vector<16x128xf32>
    %cst_5 = arith.constant 1.000000e+00 : f32
    %14 = vector.broadcast %cst_5 : f32 to vector<16x128xf32>
    %15 = arith.subf %14, %8 : vector<16x128xf32>
    %16 = arith.mulf %13, %15 : vector<16x128xf32>
    %17 = arith.addf %11, %16 : vector<16x128xf32>
    %cst_6 = arith.constant 1.000000e+00 : f32
    %18 = vector.broadcast %cst_6 : f32 to vector<16x128xf32>
    %19 = arith.subf %18, %17 : vector<16x128xf32>
    %20 = arith.mulf %19, %19 : vector<16x128xf32>
    %cst_7 = arith.constant -1.000000e+00 : f32
    %21 = vector.broadcast %cst_7 : f32 to vector<16x128xf32>
    %22 = arith.mulf %21, %20 : vector<16x128xf32>
    %cst_8 = arith.constant 1.000000e-10 : f32
    %23 = vector.broadcast %cst_8 : f32 to vector<16x128xf32>
    %24 = arith.addf %17, %23 : vector<16x128xf32>
    %25 = math.log %24 : vector<16x128xf32>
    %26 = arith.mulf %22, %25 : vector<16x128xf32>
    %c0_9 = arith.constant 0 : index
    %c0_10 = arith.constant 0 : index
    %27 = vector.load %arg4[%c0_9, %c0_10] : memref<8x128xf32, #tpu.memory_space<vmem>>, vector<8x128xf32>
    %28 = vector.shape_cast %26 : vector<16x128xf32> to vector<2x8x128xf32>
    %cst_11 = arith.constant dense<0.000000e+00> : vector<8x128xf32>
    %29 = vector.multi_reduction <add>, %28, %cst_11 [0] : vector<2x8x128xf32> to vector<8x128xf32>
    %30 = arith.addf %27, %29 : vector<8x128xf32>
    %c0_12 = arith.constant 0 : index
    %c0_13 = arith.constant 0 : index
    %31 = vector.load %arg4[%c0_12, %c0_13] : memref<8x128xf32, #tpu.memory_space<vmem>>, vector<8x128xf32>
    tpu.vector_store %arg4[%c0_12, %c0_13], %30 {strides = array<i32>} : memref<8x128xf32, #tpu.memory_space<vmem>>, vector<8x128xf32>,
    return
  }
  func.func @transform_0(%arg0: i32, %arg1: i32) -> (i32, i32) {
    %c1_i32 = arith.constant 1 : i32
    %0 = arith.muli %arg0, %c1_i32 : i32
    %1 = arith.addi %0, %arg1 : i32
    %c0_i32 = arith.constant 0 : i32
    %c0_i32_0 = arith.constant 0 : i32
    return %1, %c0_i32 : i32, i32
  }
  func.func @transform_1(%arg0: i32, %arg1: i32) -> (i32, i32) {
    %c1_i32 = arith.constant 1 : i32
    %0 = arith.muli %arg0, %c1_i32 : i32
    %1 = arith.addi %0, %arg1 : i32
    %c0_i32 = arith.constant 0 : i32
    %c0_i32_0 = arith.constant 0 : i32
    return %1, %c0_i32 : i32, i32
  }
  func.func @transform_2(%arg0: i32, %arg1: i32) -> (i32, i32) {
    %c0_i32 = arith.constant 0 : i32
    %c0_i32_0 = arith.constant 0 : i32
    return %arg0, %c0_i32 : i32, i32
  }
}

</mosaic_0001>

<llo_original>
// kernel: tpu_custom_call.1
$region0: #{tpu_custom_call.1}
  #allocation0 [shape = 'u32[]', space=smem, size = 0x4, offset = 0x4, fixed_abs, tag = 'smem constant byte address 0x4 - core index']
  #allocation1 [shape = 'u32[144,128]{1,0:T(1,128)}', space=vmem, size = 0x12000, scoped, tag = 'internal scratch']
  %s0 = inlined_call_operand.hbm [shape: f32[16,128], index: 0, kind: input, shape index: {}]
  %s1 = inlined_call_operand.hbm [shape: s8[16,128], index: 1, kind: input, shape index: {}]
  %s2 = inlined_call_operand.hbm [shape: f32[8,128], index: 2, kind: output, shape index: {}]
  %s3 = sld [smem:[#allocation0]]
  $region30: #{tpu_custom_call.1} parent=0
    _
  %s5 = ssub.s32 1, %s3
  %s6 = scalar_select 0, %s5, %s3
  $region1: #{tpu_custom_call.1} parent=0
    #allocation2 [shape = 'u8[8192]{0}', space=vmem, size = 0x2000, scoped, tag = 'input window, operand 0, single buffered']
    #allocation3 [shape = 's32[1]{0}', space=sflag, size = 0x4, scoped, tag = 'scoped memory for tpu_custom_call.1']
    #allocation4 [shape = 's32[1]{0}', space=sflag, size = 0x4, scoped, tag = 'scoped memory for tpu_custom_call.1']
    #allocation5 [shape = 'u8[2048]{0}', space=vmem, size = 0x800, scoped, tag = 'input window, operand 1, single buffered']
    #allocation6 [shape = 's32[1]{0}', space=sflag, size = 0x4, scoped, tag = 'scoped memory for tpu_custom_call.1']
    #allocation7 [shape = 'u8[4096]{0}', space=vmem, size = 0x1000, scoped, tag = 'output window, operand 0, single buffered']
    %7 = vsyncpa [#allocation3], 0
    %8 = vsyncpa [#allocation6], 0
    %9 = vsyncpa [#allocation4], 0
    // Predicated region
    $region2: #{tpu_custom_call.1} parent=1 // pred_check
      _
    $region3: #{tpu_custom_call.1} parent=1 // pred_check_branch
      %11 = sbr.rel (0) target = $region5
    $region4: #{tpu_custom_call.1} parent=1 // pred_region
      %s12 = sadd.s32 0, 0
      %s13 = smul.u32 2, %s12
      %s15 = ssub.s32 256, 256
      %16 = vsyncadd [#allocation3], %s15
      %s17 = smul.addr %s13, 128
      %s18 = scalar_lea.hbm %s0, %s17
      %s19 = sshll.u32 [#allocation2], 4
      %s20 = int_to_ptr.vmem [resolvable:$true] %s19
      %25 = dma.hbm_to_vmem [thread:$0]  %s18, 256, %s20, [#allocation3], 128, 128, 8
    $region5: #{tpu_custom_call.1} parent=1 // pred_fallthru
      _
    // Predicated region
    $region6: #{tpu_custom_call.1} parent=1 // pred_check
      _
    $region7: #{tpu_custom_call.1} parent=1 // pred_check_branch
      %27 = sbr.rel (0) target = $region9
    $region8: #{tpu_custom_call.1} parent=1 // pred_region
      %s28 = sadd.s32 0, 0
      %s29 = smul.u32 2, %s28
      %s31 = ssub.s32 64, 64
      %32 = vsyncadd [#allocation6], %s31
      %s33 = smul.addr %s29, 32
      %s34 = scalar_lea.hbm %s1, %s33
      %s35 = sshll.u32 [#allocation5], 4
      %s36 = int_to_ptr.vmem [resolvable:$true] %s35
      %41 = dma.hbm_to_vmem [thread:$0]  %s34, 64, %s36, [#allocation6], 32, 32, 2
    $region9: #{tpu_custom_call.1} parent=1 // pred_fallthru
      _
    // Predicated region
    $region10: #{tpu_custom_call.1} parent=1 // pred_check
      _
    $region11: #{tpu_custom_call.1} parent=1 // pred_check_branch
      %43 = sbr.rel (0) target = $region13
    $region12: #{tpu_custom_call.1} parent=1 // pred_region
      %44 = dma.done [#allocation3], 256
    $region13: #{tpu_custom_call.1} parent=1 // pred_fallthru
      _
    // Predicated region
    $region14: #{tpu_custom_call.1} parent=1 // pred_check
      _
    $region15: #{tpu_custom_call.1} parent=1 // pred_check_branch
      %46 = sbr.rel (0) target = $region17
    $region16: #{tpu_custom_call.1} parent=1 // pred_region
      %47 = dma.done [#allocation6], 64
    $region17: #{tpu_custom_call.1} parent=1 // pred_fallthru
      _
    %s48 = sadd.s32 0, 0
    %s49 = smul.u32 2, %s48
    %s50 = sadd.s32 0, 0
    %s51 = smul.u32 2, %s50
    %p52 = scmp.eq.s32.totalorder 0, 0
    // Predicated region
    $region18: #{tpu_custom_call.1} parent=1 // pred_check
      %p53 = pneg %p52
    $region19: #{tpu_custom_call.1} parent=1 // pred_check_branch
      %55 = sbr.rel (%p53) target = $region21
    $region20: #{tpu_custom_call.1} parent=1 // pred_region
      %56 = vst [vmem:[#allocation7] sm:$0xff] 0.0
    $region21: #{tpu_custom_call.1} parent=1 // pred_fallthru
      _
    %v57 = vld [vmem:[#allocation2] sm:$0xff]
    %v58 = vld [vmem:[#allocation2 + $0x8] sm:$0xff]
    %v59 = vxor.u32 %v57, 2147483648
    %v60 = vxor.u32 %v58, 2147483648
    %v61 = vmul.f32 %v59, 1.442695
    %v62 = vpow.pop %v61
    %v63 = vmul.f32 %v60, 1.442695
    %v64 = vpow.pop %v63
    %v65 = vadd.f32 %v62, 1.0
    %v66 = vadd.f32 %v64, 1.0
    %v67 = vrcp.pop %v65
    %v68 = vmul.f32 1.0, %v67
    %v69 = vrcp.pop %v66
    %v70 = vmul.f32 1.0, %v69
    %v71 = vld [vmem:[#allocation5] sm:$0x3]
    %v72 = vld [vmem:[#allocation5 + $0x2] sm:$0x3]
    %v73 = vunpack.c.0.s8 %v71
    %v74 = vunpack.c.0.s8 %v72
    %v75 = vcvt.s32.f32 %v73
    %v76 = vcvt.s32.f32 %v74
    %v77 = vmul.f32 %v75, %v68
    %v78 = vmul.f32 %v76, %v70
    %v79 = vsub.f32 1.0, %v75
    %v80 = vsub.f32 1.0, %v76
    %v81 = vsub.f32 1.0, %v68
    %v82 = vsub.f32 1.0, %v70
    %v83 = vmul.f32 %v79, %v81
    %v84 = vmul.f32 %v80, %v82
    %v85 = vadd.f32 %v77, %v83
    %v86 = vadd.f32 %v78, %v84
    %v87 = vsub.f32 1.0, %v85
    %v88 = vsub.f32 1.0, %v86
    %v89 = vmul.f32 %v87, %v87
    %v90 = vmul.f32 %v88, %v88
    %v91 = vmul.f32 %v89, -1.0
    %v92 = vmul.f32 %v90, -1.0
    %v93 = vadd.f32 %v85, 1e-10
    %v94 = vadd.f32 %v86, 1e-10
    %v95 = vlog2.pop %v93
    %v96 = vmul.f32 %v95, 0.6931472
    %v97 = vlog2.pop %v94
    %v98 = vmul.f32 %v97, 0.6931472
    %v99 = vmul.f32 %v91, %v96
    %v100 = vmul.f32 %v92, %v98
    %v101 = vld [vmem:[#allocation7] sm:$0xff]
    %v102 = vadd.f32 %v99, %v100
    %v103 = vadd.f32 %v101, %v102
    %104 = vst [vmem:[#allocation7] sm:$0xff] %v103
    // Predicated region
    $region22: #{tpu_custom_call.1} parent=1 // pred_check
      _
    $region23: #{tpu_custom_call.1} parent=1 // pred_check_branch
      %106 = sbr.rel (0) target = $region25
    $region24: #{tpu_custom_call.1} parent=1 // pred_region
      %s108 = ssub.s32 128, 128
      %109 = vsyncadd [#allocation4], %s108
      %s111 = sshll.u32 [#allocation7], 4
      %s112 = int_to_ptr.vmem [resolvable:$true] %s111
      %114 = dma.vmem_to_hbm [thread:$0]  %s112, 128, %s2, [#allocation4]
    $region25: #{tpu_custom_call.1} parent=1 // pred_fallthru
      _
    // Predicated region
    $region26: #{tpu_custom_call.1} parent=1 // pred_check
      _
    $region27: #{tpu_custom_call.1} parent=1 // pred_check_branch
      %116 = sbr.rel (0) target = $region29
    $region28: #{tpu_custom_call.1} parent=1 // pred_region
      %117 = dma.done [#allocation4], 128
    $region29: #{tpu_custom_call.1} parent=1 // pred_fallthru
      _
    %118 = vsyncpa [#allocation3], 1
    %119 = vsyncpa [#allocation6], 1
    %120 = vsyncpa [#allocation4], 1

</llo_original>
